<compile_context>
chip_gen: v5e
topology: v5e:2x2
jax: 0.10.0
libtpu: 0.0.40
codegen_flags: <defaults>
</compile_context>

<pallas_src>
import functools

import jax
import jax.numpy as jnp
import numpy as np
from jax.experimental import pallas as pl
from jax.experimental.pallas import tpu as pltpu

EARTH_RADIUS = 6371.01
PI_ON_180 = 0.017453292519943295
LANES = 128


def _round_up(x, m):
    return ((x + m - 1) // m) * m


def _asin_f32(x):
    """float32 asin for x in [0, 1], built only from mul/add/sqrt/select.

    Cephes-style asinf (same algorithm libm/XLA use for f32), ~1 ulp on [0, 1].
    Used because lax.asin_p has no guaranteed Mosaic TPU lowering.
    """
    # TODO(synk): replace with jnp.arcsin if/when Mosaic lowers lax.asin_p.
    big = x > 0.5
    z_big = 0.5 * (1.0 - x)
    xx = jnp.where(big, jnp.sqrt(z_big), x)
    z = jnp.where(big, z_big, x * x)
    p = ((((4.2163199048e-2 * z + 2.4181311049e-2) * z
           + 4.5470025998e-2) * z
          + 7.4953002686e-2) * z
         + 1.6666752422e-1) * z * xx + xx
    half_pi = 1.5707963267948966
    return jnp.where(big, half_pi - 2.0 * p, p)


def _haversine_kernel(slab_ref, o_ref):
    """Consume one (br, 512) slab tile; accumulate half-angle arcsins into (8, 128)."""
    i = pl.program_id(1)   # tile index within this split (reduction axis)

    @pl.when(i == 0)
    def _():
        o_ref[...] = jnp.zeros_like(o_ref)

    s = slab_ref[...]                         # (br, 512), lane-grouped SoA
    lat1 = s[:, 0 * LANES:1 * LANES]
    lon1 = s[:, 1 * LANES:2 * LANES]
    lat2 = s[:, 2 * LANES:3 * LANES]
    lon2 = s[:, 3 * LANES:4 * LANES]

    half_rad = 0.5 * PI_ON_180                # fold /2 into deg->rad
    sin_hlat = jnp.sin((lat2 - lat1) * half_rad)
    sin_hlon = jnp.sin((lon2 - lon1) * half_rad)
    cos_sum = jnp.cos((lat1 + lat2) * PI_ON_180)

    hav_lat = sin_hlat * sin_hlat             # sin^2(dlat/2) -- exact, as in reference
    hav_lon = sin_hlon * sin_hlon             # sin^2(dlon/2)
    # cos(lat1)*cos(lat2) = 0.5*(cos(dlat) + cos(lat1+lat2)), cos(dlat) = 1 - 2*hav_lat.
    coscos = 0.5 * (1.0 - 2.0 * hav_lat + cos_sum)
    a = hav_lat + coscos * hav_lon

    # Clamp so near-antipodal points (a + eps > 1) don't NaN-poison the mean.
    x = jnp.minimum(jnp.sqrt(a + 1e-7), 1.0)
    half_c = _asin_f32(x)                     # distance = 2*R*half_c (scale deferred)

    br = half_c.shape[0]
    o_ref[...] += jnp.sum(half_c.reshape(br // 8, 8, LANES), axis=0)


@functools.partial(jax.jit, static_argnames=("block_rows", "num_splits"))
def haversine_loss(preds, targets, *, block_rows=1024, num_splits=None):
    """preds, targets: (N, 2) float32, columns [lat_deg, lon_deg] -> scalar km."""
    preds = jnp.asarray(preds, jnp.float32)
    targets = jnp.asarray(targets, jnp.float32)
    n = preds.shape[0]

    block_rows = _round_up(block_rows, 8)
    rows = pl.cdiv(n, LANES)
    br = min(block_rows, _round_up(rows, 8))
    total_tiles = pl.cdiv(rows, br)
    if num_splits is None:
        # Megacore split only pays off when each core still has a pipeline to run
        # and the extra padding is negligible.
        num_splits = 2 if total_tiles >= 8 else 1
    tiles_per_split = pl.cdiv(total_tiles, num_splits)
    rows_padded = br * num_splits * tiles_per_split
    n_pad = rows_padded * LANES

    # Single fused prep pass: AoS (N,2)x2 -> one lane-grouped SoA slab
    # (rows_padded, 512): lanes [0:128)=lat1, [128:256)=lon1, [256:384)=lat2,
    # [384:512)=lon2.  Zero padding is exploited (not masked) in the kernel.
    # TODO(synk): kill this pass via CompilerParams(allow_input_fusion=...).
    pts = jnp.concatenate([preds, targets], axis=1)        # (n, 4)
    pts = jnp.pad(pts, ((0, n_pad - n), (0, 0)))           # (n_pad, 4)
    slab = (pts.reshape(rows_padded, LANES, 4)
            .transpose(0, 2, 1)
            .reshape(rows_padded, 4 * LANES))

    in_spec = pl.BlockSpec((br, 4 * LANES),
                           lambda c, i: (c * tiles_per_split + i, 0))
    out_spec = pl.BlockSpec((8, LANES), lambda c, i: (c, 0))

    partials = pl.pallas_call(
        _haversine_kernel,
        out_shape=jax.ShapeDtypeStruct((num_splits * 8, LANES), jnp.float32),
        grid_spec=pltpu.PrefetchScalarGridSpec(
            num_scalar_prefetch=0,
            grid=(num_splits, tiles_per_split),
            in_specs=[in_spec],
            out_specs=out_spec),
        compiler_params=pltpu.CompilerParams(
            dimension_semantics=("parallel", "arbitrary"),
            vmem_limit_bytes=32 * 1024 * 1024),
    )(slab)

    # Every zero-padded point contributes exactly asin(sqrt(0 + 1e-7)); subtract
    # it once here instead of masking per element inside the kernel.
    pad_half_c = _asin_f32(jnp.minimum(jnp.sqrt(jnp.float32(1e-7)),
                                       jnp.float32(1.0)))
    total = jnp.sum(partials) - (n_pad - n) * pad_half_c

    # Scale by 2*R and divide by the true N exactly once.
    return (2.0 * EARTH_RADIUS / n) * total


def haversine_loss_ref(preds, targets):
    """Pure-JAX reference mirroring the PyTorch module."""
    lat1 = preds[:, 0] * PI_ON_180
    lon1 = preds[:, 1] * PI_ON_180
    lat2 = targets[:, 0] * PI_ON_180
    lon2 = targets[:, 1] * PI_ON_180
    dlat = lat2 - lat1
    dlon = lon2 - lon1
    a = jnp.sin(dlat / 2) ** 2 + jnp.cos(lat1) * jnp.cos(lat2) * jnp.sin(dlon / 2) ** 2
    c = 2 * jnp.arcsin(jnp.sqrt(a + 1e-7))
    return (EARTH_RADIUS * c).mean()


def _make_inputs(key, n):
    k1, k2, k3, k4 = jax.random.split(key, 4)
    preds = jnp.stack(
        [jax.random.uniform(k1, (n,), jnp.float32, -90.0, 90.0),
         jax.random.uniform(k2, (n,), jnp.float32, -180.0, 180.0)], axis=1)
    targets = jnp.stack(
        [jax.random.uniform(k3, (n,), jnp.float32, -90.0, 90.0),
         jax.random.uniform(k4, (n,), jnp.float32, -180.0, 180.0)], axis=1)
    return preds, targets


if __name__ == "__main__":
    key = jax.random.PRNGKey(0)
    k_small, k_multi = jax.random.split(key, 2)

    checks = []

    # Small shape consistent with the module: (N, 2) with N = 8.
    preds, targets = _make_inputs(k_small, 8)
    checks.append(("N=8 default",
                   haversine_loss(preds, targets),
                   haversine_loss_ref(preds, targets)))

    # Multi-tile accumulation + zero-pad correction (N not a tile multiple).
    preds2, targets2 = _make_inputs(k_multi, 3000)
    checks.append(("N=3000 block_rows=8",
                   haversine_loss(preds2, targets2, block_rows=8),
                   haversine_loss_ref(preds2, targets2)))

    # Exercise the parallel split axis (2 output accumulators + extra padding).
    checks.append(("N=3000 block_rows=8 num_splits=2",
                   haversine_loss(preds2, targets2, block_rows=8, num_splits=2),
                   haversine_loss_ref(preds2, targets2)))

    for name, got, want in checks:
        got = np.asarray(jax.block_until_ready(got))
        want = np.asarray(jax.block_until_ready(want))
        if not np.allclose(got, want, rtol=1e-4, atol=1e-3):
            raise AssertionError(f"mismatch ({name}): pallas={got} ref={want}")

    print("KERNEL_OK")
</pallas_src>

<mosaic_0001>
module attributes {stable_mosaic.version = 11 : i64} {
  func.func @_haversine_kernel(%arg0: i32, %arg1: i32, %arg2: memref<8x512xf32, #tpu.memory_space<vmem>>, %arg3: memref<8x128xf32, #tpu.memory_space<vmem>>) attributes {dimension_semantics = [#tpu.dimension_semantics<parallel>, #tpu.dimension_semantics<arbitrary>], iteration_bounds = array<i64: 1, 1>, scalar_prefetch = 0 : i64, scratch_operands = 0 : i64, tpu.core_type = #tpu.core_type<tc>, window_params = [{transform_indices = @transform_0, window_bounds = array<i64: 8, 512>}, {transform_indices = @transform_1, window_bounds = array<i64: 8, 128>}]} {
    %c0_i32 = arith.constant 0 : i32
    %0 = arith.cmpi eq, %arg1, %c0_i32 : i32
    %1 = arith.extui %0 : i1 to i32
    %c0_i32_0 = arith.constant 0 : i32
    %2 = arith.cmpi ne, %1, %c0_i32_0 : i32
    scf.if %2 {
      %cst_24 = arith.constant 0.000000e+00 : f32
      %72 = vector.broadcast %cst_24 : f32 to vector<8x128xf32>
      %c0_25 = arith.constant 0 : index
      %c0_26 = arith.constant 0 : index
      %73 = vector.load %arg3[%c0_25, %c0_26] : memref<8x128xf32, #tpu.memory_space<vmem>>, vector<8x128xf32>
      tpu.vector_store %arg3[%c0_25, %c0_26], %72 {strides = array<i32>} : memref<8x128xf32, #tpu.memory_space<vmem>>, vector<8x128xf32>,
    } else {
    }
    %c0 = arith.constant 0 : index
    %c0_1 = arith.constant 0 : index
    %3 = vector.load %arg2[%c0, %c0_1] : memref<8x512xf32, #tpu.memory_space<vmem>>, vector<8x512xf32>
    %4 = vector.extract_strided_slice %3 {offsets = [0, 0], sizes = [8, 128], strides = [1, 1]} : vector<8x512xf32> to vector<8x128xf32>
    %5 = vector.extract_strided_slice %3 {offsets = [0, 128], sizes = [8, 128], strides = [1, 1]} : vector<8x512xf32> to vector<8x128xf32>
    %6 = vector.extract_strided_slice %3 {offsets = [0, 256], sizes = [8, 128], strides = [1, 1]} : vector<8x512xf32> to vector<8x128xf32>
    %7 = vector.extract_strided_slice %3 {offsets = [0, 384], sizes = [8, 128], strides = [1, 1]} : vector<8x512xf32> to vector<8x128xf32>
    %8 = arith.subf %6, %4 : vector<8x128xf32>
    %cst = arith.constant 0.00872664619 : f32
    %9 = vector.broadcast %cst : f32 to vector<8x128xf32>
    %10 = arith.mulf %8, %9 : vector<8x128xf32>
    %11 = math.sin %10 : vector<8x128xf32>
    %12 = arith.subf %7, %5 : vector<8x128xf32>
    %cst_2 = arith.constant 0.00872664619 : f32
    %13 = vector.broadcast %cst_2 : f32 to vector<8x128xf32>
    %14 = arith.mulf %12, %13 : vector<8x128xf32>
    %15 = math.sin %14 : vector<8x128xf32>
    %16 = arith.addf %4, %6 : vector<8x128xf32>
    %cst_3 = arith.constant 0.0174532924 : f32
    %17 = vector.broadcast %cst_3 : f32 to vector<8x128xf32>
    %18 = arith.mulf %16, %17 : vector<8x128xf32>
    %19 = math.cos %18 : vector<8x128xf32>
    %20 = arith.mulf %11, %11 : vector<8x128xf32>
    %21 = arith.mulf %15, %15 : vector<8x128xf32>
    %cst_4 = arith.constant 2.000000e+00 : f32
    %22 = vector.broadcast %cst_4 : f32 to vector<8x128xf32>
    %23 = arith.mulf %22, %20 : vector<8x128xf32>
    %cst_5 = arith.constant 1.000000e+00 : f32
    %24 = vector.broadcast %cst_5 : f32 to vector<8x128xf32>
    %25 = arith.subf %24, %23 : vector<8x128xf32>
    %26 = arith.addf %25, %19 : vector<8x128xf32>
    %cst_6 = arith.constant 5.000000e-01 : f32
    %27 = vector.broadcast %cst_6 : f32 to vector<8x128xf32>
    %28 = arith.mulf %27, %26 : vector<8x128xf32>
    %29 = arith.mulf %28, %21 : vector<8x128xf32>
    %30 = arith.addf %20, %29 : vector<8x128xf32>
    %cst_7 = arith.constant 1.000000e-07 : f32
    %31 = vector.broadcast %cst_7 : f32 to vector<8x128xf32>
    %32 = arith.addf %30, %31 : vector<8x128xf32>
    %33 = math.sqrt %32 : vector<8x128xf32>
    %cst_8 = arith.constant 1.000000e+00 : f32
    %34 = vector.broadcast %cst_8 : f32 to vector<8x128xf32>
    %35 = arith.minimumf %33, %34 : vector<8x128xf32>
    %cst_9 = arith.constant 5.000000e-01 : f32
    %36 = vector.broadcast %cst_9 : f32 to vector<8x128xf32>
    %37 = arith.cmpf ogt, %35, %36 : vector<8x128xf32>
    %cst_10 = arith.constant 1.000000e+00 : f32
    %38 = vector.broadcast %cst_10 : f32 to vector<8x128xf32>
    %39 = arith.subf %38, %35 : vector<8x128xf32>
    %cst_11 = arith.constant 5.000000e-01 : f32
    %40 = vector.broadcast %cst_11 : f32 to vector<8x128xf32>
    %41 = arith.mulf %40, %39 : vector<8x128xf32>
    %42 = math.sqrt %41 : vector<8x128xf32>
    %43 = arith.select %37, %42, %35 : vector<8x128xi1>, vector<8x128xf32>
    %44 = arith.mulf %35, %35 : vector<8x128xf32>
    %45 = arith.select %37, %41, %44 : vector<8x128xi1>, vector<8x128xf32>
    %cst_12 = arith.constant 4.216320e-02 : f32
    %46 = vector.broadcast %cst_12 : f32 to vector<8x128xf32>
    %47 = arith.mulf %46, %45 : vector<8x128xf32>
    %cst_13 = arith.constant 0.024181312 : f32
    %48 = vector.broadcast %cst_13 : f32 to vector<8x128xf32>
    %49 = arith.addf %47, %48 : vector<8x128xf32>
    %50 = arith.mulf %49, %45 : vector<8x128xf32>
    %cst_14 = arith.constant 0.0454700254 : f32
    %51 = vector.broadcast %cst_14 : f32 to vector<8x128xf32>
    %52 = arith.addf %50, %51 : vector<8x128xf32>
    %53 = arith.mulf %52, %45 : vector<8x128xf32>
    %cst_15 = arith.constant 0.0749530047 : f32
    %54 = vector.broadcast %cst_15 : f32 to vector<8x128xf32>
    %55 = arith.addf %53, %54 : vector<8x128xf32>
    %56 = arith.mulf %55, %45 : vector<8x128xf32>
    %cst_16 = arith.constant 0.166667521 : f32
    %57 = vector.broadcast %cst_16 : f32 to vector<8x128xf32>
    %58 = arith.addf %56, %57 : vector<8x128xf32>
    %59 = arith.mulf %58, %45 : vector<8x128xf32>
    %60 = arith.mulf %59, %43 : vector<8x128xf32>
    %61 = arith.addf %60, %43 : vector<8x128xf32>
    %cst_17 = arith.constant 2.000000e+00 : f32
    %62 = vector.broadcast %cst_17 : f32 to vector<8x128xf32>
    %63 = arith.mulf %62, %61 : vector<8x128xf32>
    %cst_18 = arith.constant 1.57079637 : f32
    %64 = vector.broadcast %cst_18 : f32 to vector<8x128xf32>
    %65 = arith.subf %64, %63 : vector<8x128xf32>
    %66 = arith.select %37, %65, %61 : vector<8x128xi1>, vector<8x128xf32>
    %c0_19 = arith.constant 0 : index
    %c0_20 = arith.constant 0 : index
    %67 = vector.load %arg3[%c0_19, %c0_20] : memref<8x128xf32, #tpu.memory_space<vmem>>, vector<8x128xf32>
    %68 = vector.shape_cast %66 : vector<8x128xf32> to vector<1x8x128xf32>
    %cst_21 = arith.constant dense<0.000000e+00> : vector<8x128xf32>
    %69 = vector.multi_reduction <add>, %68, %cst_21 [0] : vector<1x8x128xf32> to vector<8x128xf32>
    %70 = arith.addf %67, %69 : vector<8x128xf32>
    %c0_22 = arith.constant 0 : index
    %c0_23 = arith.constant 0 : index
    %71 = vector.load %arg3[%c0_22, %c0_23] : memref<8x128xf32, #tpu.memory_space<vmem>>, vector<8x128xf32>
    tpu.vector_store %arg3[%c0_22, %c0_23], %70 {strides = array<i32>} : memref<8x128xf32, #tpu.memory_space<vmem>>, vector<8x128xf32>,
    return
  }
  func.func @transform_0(%arg0: i32, %arg1: i32) -> (i32, i32) {
    %c1_i32 = arith.constant 1 : i32
    %0 = arith.muli %arg0, %c1_i32 : i32
    %1 = arith.addi %0, %arg1 : i32
    %c0_i32 = arith.constant 0 : i32
    %c0_i32_0 = arith.constant 0 : i32
    return %1, %c0_i32 : i32, i32
  }
  func.func @transform_1(%arg0: i32, %arg1: i32) -> (i32, i32) {
    %c0_i32 = arith.constant 0 : i32
    %c0_i32_0 = arith.constant 0 : i32
    return %arg0, %c0_i32 : i32, i32
  }
}

</mosaic_0001>

<llo_original>
// kernel: haversine_loss.1
$region0: #{haversine_loss.1}
  #allocation0 [shape = 'u32[]', space=smem, size = 0x4, offset = 0x4, fixed_abs, tag = 'smem constant byte address 0x4 - core index']
  #allocation1 [shape = 'u32[72,128]{1,0:T(1,128)}', space=vmem, size = 0x9000, scoped, tag = 'internal scratch']
  %s0 = inlined_call_operand.vmem [shape: f32[8,512], index: 0, kind: input, shape index: {}]
  %s1 = inlined_call_operand.vmem [shape: f32[8,128], index: 1, kind: output, shape index: {}]
  %s2 = sld [smem:[#allocation0]]
  $region18: #{haversine_loss.1} parent=0
    _
  %s4 = ssub.s32 1, %s2
  %s5 = scalar_select 0, %s4, %s2
  // Predicated region
  $region2: #{haversine_loss.1} parent=0 // pred_check
    _
  $region3: #{haversine_loss.1} parent=0 // pred_check_branch
    %7 = sbr.rel (0) target = $region5
  $region4: #{haversine_loss.1} parent=0 // pred_region
    %s8 = sadd.s32 0, 0
    %p9 = scmp.lt.s32.totalorder %s8, 0
    %s10 = scalar_select %p9, %s8, 0
    %s11 = smul.addr %s10, 4
    %s12 = smul.addr %s11, 8
    %s13 = scalar_lea.vmem %s0, %s12
    %s14 = sadd.s32 0, 0
  $region5: #{haversine_loss.1} parent=0 // pred_fallthru
    _
  %s15 = sadd.s32 0, 0
  %p16 = scmp.lt.s32.totalorder %s15, 0
  %s17 = scalar_select %p16, %s15, 0
  %s18 = smul.addr %s17, 4
  %s19 = smul.addr %s18, 8
  %s20 = scalar_lea.vmem %s0, %s19
  %s21 = sadd.s32 0, 0
  %p22 = scmp.lt.s32.totalorder %s21, 0
  %s23 = scalar_select %p22, %s21, 0
  %s24 = smul.addr %s23, 4
  %s25 = smul.addr %s24, 8
  %s26 = scalar_lea.vmem %s0, %s25
  %s27 = sadd.s32 0, 0
  %p28 = scmp.eq.s32.totalorder 0, 0
  // Predicated region
  $region6: #{haversine_loss.1} parent=0 // pred_check
    %p29 = pneg %p28
  $region7: #{haversine_loss.1} parent=0 // pred_check_branch
    %31 = sbr.rel (%p29) target = $region9
  $region8: #{haversine_loss.1} parent=0 // pred_region
    %32 = vst [vmem:[%s1] sm:$0xff] 0.0
  $region9: #{haversine_loss.1} parent=0 // pred_fallthru
    _
  %v33 = vld [vmem:[%s26] sm:$0xff]
  %v34 = vld [vmem:[%s26 + $0x8] sm:$0xff]
  %v35 = vld [vmem:[%s26 + $0x10] sm:$0xff]
  %v36 = vld [vmem:[%s26 + $0x18] sm:$0xff]
  %v37 = vsub.f32 %v35, %v33
  %v38 = vmul.f32 %v37, 0.008726646
  %v39 = vand.u32 2147483647, %v38
  %vm40 = vcmp.le.f32.partialorder %v39, 0.7853982
  %vm41 = vcmp.lt.s32.totalorder %v38, 0
  %v42 = vand.u32 %v38, 2139095040
  %v43 = vshrl.u32 %v42, 23
  %v44 = vsub.s32 %v43, 127
  %v45 = vand.u32 2147483647, %v38
  %v46 = vand.u32 %v45, 8388607
  %v47 = vor.u32 %v46, 8388608
  %v48 = vsub.s32 0, %v47
  %v49 = vadd.s32 %v44, 1
  %vm50 = vcmp.gt.s32.totalorder %v49, 0
  %v51 = vsel %vm50, %v49, 0
  %v52 = vshrl.u32 %v51, 5
  %v53 = vand.u32 %v51, 31
  %v54 = vsub.s32 32, %v53
  %v55 = vshrl.u32 683565275, %v54
  %v56 = vshll.u32 683565275, %v53
  %v57 = vshrl.u32 2475754826, %v54
  %v58 = vor.u32 %v56, %v57
  %v59 = vshll.u32 2475754826, %v53
  %v60 = vshrl.u32 2131351028, %v54
  %v61 = vor.u32 %v59, %v60
  %v62 = vshll.u32 2131351028, %v53
  %v63 = vshrl.u32 2102212464, %v54
  %v64 = vor.u32 %v62, %v63
  %v65 = vshll.u32 2102212464, %v53
  %v66 = vshrl.u32 920167782, %v54
  %v67 = vor.u32 %v65, %v66
  %v68 = vshll.u32 920167782, %v53
  %v69 = vshrl.u32 1326507024, %v54
  %v70 = vor.u32 %v68, %v69
  %vm71 = vcmp.lt.s32.totalorder %v52, 1
  %vm72 = vcmp.lt.s32.totalorder %v52, 2
  %vm73 = vcmp.lt.s32.totalorder %v52, 3
  %vm74 = vcmp.lt.s32.totalorder %v52, 4
  %v75 = vsel %vm71, %v55, %v58
  %v76 = vsel %vm74, %v64, 2102212464
  %v77 = vsel %vm73, %v61, %v76
  %v78 = vsel %vm72, %v75, %v77
  %v79 = vsel %vm71, %v58, %v61
  %v80 = vsel %vm74, %v67, 920167782
  %v81 = vsel %vm73, %v64, %v80
  %v82 = vsel %vm72, %v79, %v81
  %v83 = vsel %vm71, %v61, %v64
  %v84 = vsel %vm74, %v70, 1326507024
  %v85 = vsel %vm73, %v67, %v84
  %v86 = vsel %vm72, %v83, %v85
  %v87 = vshll.u32 %v47, 8
  %v88 = vand.u32 %v87, 65535
  %v89 = vshrl.u32 %v87, 16
  %v90 = vand.u32 %v86, 65535
  %v91 = vshrl.u32 %v86, 16
  %v92 = vmul.u32 %v88, %v90
  %v93 = vmul.u32 %v88, %v91
  %v94 = vmul.u32 %v89, %v90
  %v95 = vmul.u32 %v89, %v91
  %v96 = vshll.u32 %v93, 16
  %v97 = vshrl.u32 %v93, 16
  %v98 = vshll.u32 %v94, 16
  %v99 = vshrl.u32 %v94, 16
  %vm100 = vc.u32 %v92, %v96
  %v101 = vsel %vm100, 1, 0
  %v102 = vadd.s32 %v92, %v96
  %v103 = vadd.s32 %v95, %v101
  %vm104 = vc.u32 %v102, %v98
  %v105 = vsel %vm104, 1, 0
  %v106 = vadd.s32 %v102, %v98
  %v107 = vadd.s32 %v103, %v105
  %v108 = vadd.s32 %v107, %v97
  %v109 = vadd.s32 %v108, %v99
  %v110 = vand.u32 %v87, 65535
  %v111 = vshrl.u32 %v87, 16
  %v112 = vand.u32 %v82, 65535
  %v113 = vshrl.u32 %v82, 16
  %v114 = vmul.u32 %v110, %v112
  %v115 = vmul.u32 %v110, %v113
  %v116 = vmul.u32 %v111, %v112
  %v117 = vmul.u32 %v111, %v113
  %v118 = vshll.u32 %v115, 16
  %v119 = vshrl.u32 %v115, 16
  %v120 = vshll.u32 %v116, 16
  %v121 = vshrl.u32 %v116, 16
  %vm122 = vc.u32 %v114, %v118
  %v123 = vsel %vm122, 1, 0
  %v124 = vadd.s32 %v114, %v118
  %v125 = vadd.s32 %v117, %v123
  %vm126 = vc.u32 %v124, %v120
  %v127 = vsel %vm126, 1, 0
  %v128 = vadd.s32 %v124, %v120
  %v129 = vadd.s32 %v125, %v127
  %v130 = vadd.s32 %v129, %v119
  %v131 = vadd.s32 %v130, %v121
  %v132 = vmul.u32 %v87, %v78
  %v133 = vadd.s32 %v109, %v128
  %vm134 = vc.u32 %v109, %v128
  %v135 = vadd.s32 %v131, 1
  %v136 = vsel %vm134, %v135, %v131
  %v137 = vadd.s32 %v132, %v136
  %v138 = vadd.s32 %v137, 536870912
  %v139 = vshrl.u32 %v138, 30
  %v140 = vshll.u32 %v139, 30
  %v141 = vsub.s32 %v137, %v140
  %vm142 = vcmp.lt.s32.totalorder %v141, 0
  %v143 = vsub.s32 0, %v141
  %v144 = vsel %vm142, %v143, %v141
  %v145 = vclz %v144
  %v146 = vsub.s32 %v145, 2
  %vm147 = vcmp.gt.s32.totalorder 0, %v146
  %v148 = vsel %vm147, 0, %v146
  %v149 = vsub.s32 32, %v148
  %v150 = vshll.u32 %v141, %v148
  %v151 = vshrl.u32 %v133, %v149
  %v152 = vor.u32 %v150, %v151
  %v153 = vsub.s32 4294967266, %v148
  %v154 = vadd.s32 %v153, 127
  %v155 = vshll.u32 %v154, 23
  %v156 = vor.u32 4788187, %v155
  %v157 = vand.u32 2147483647, %v156
  %v159 = vcvt.s32.f32 %v152
  %v160 = vmul.f32 %v159, %v157
  %v161 = vxor.u32 %v160, 2147483648
  %v162 = vsel %vm41, %v161, %v160
  %v163 = vsub.s32 4, %v139
  %v164 = vsel %vm41, %v163, %v139
  %v165 = vsel %vm40, %v38, %v162
  %v166 = vsel %vm40, 0, %v164
  %v167 = vmul.f32 %v165, %v165
  %v168 = vmul.f32 %v167, -0.001358992
  %v169 = vadd.f32 %v168, 0.041655596
  %v170 = vmul.f32 %v167, %v169
  %v171 = vadd.f32 %v170, -0.4999988
  %v172 = vmul.f32 %v167, %v171
  %v173 = vadd.f32 1.0, %v172
  %v174 = vmul.f32 %v165, %v165
  %v175 = vmul.f32 %v174, -0.00019511016
  %v176 = vadd.f32 %v175, 0.008332121
  %v177 = vmul.f32 %v174, %v176
  %v178 = vadd.f32 %v177, -0.16666654
  %v179 = vmul.f32 %v174, %v178
  %v180 = vadd.f32 %v179, 1.0
  %v181 = vmul.f32 %v180, %v165
  %vm182 = vweird.f32 %v38
  %v183 = vadd.s32 %v166, 3
  %v184 = vand.u32 %v183, 3
  %vm185 = vcmp.lt.s32.totalorder %v184, 2
  %vm186 = vcmp.eq.s32.totalorder %v184, 0
  %v187 = vxor.u32 %v181, 2147483648
  %v188 = vsel %vm186, %v173, %v187
  %vm189 = vcmp.eq.s32.totalorder %v184, 2
  %v190 = vxor.u32 %v173, 2147483648
  %v191 = vsel %vm189, %v190, %v181
  %v192 = vsel %vm185, %v188, %v191
  %v193 = vsel %vm182, nan, %v192
  %v194 = vsub.f32 %v36, %v34
  %v195 = vmul.f32 %v194, 0.008726646
  %v196 = vand.u32 2147483647, %v195
  %vm197 = vcmp.le.f32.partialorder %v196, 0.7853982
  %vm198 = vcmp.lt.s32.totalorder %v195, 0
  %v199 = vand.u32 %v195, 2139095040
  %v200 = vshrl.u32 %v199, 23
  %v201 = vsub.s32 %v200, 127
  %v202 = vand.u32 2147483647, %v195
  %v203 = vand.u32 %v202, 8388607
  %v204 = vor.u32 %v203, 8388608
  %v205 = vsub.s32 0, %v204
  %v206 = vadd.s32 %v201, 1
  %vm207 = vcmp.gt.s32.totalorder %v206, 0
  %v208 = vsel %vm207, %v206, 0
  %v209 = vshrl.u32 %v208, 5
  %v210 = vand.u32 %v208, 31
  %v211 = vsub.s32 32, %v210
  %v212 = vshrl.u32 683565275, %v211
  %v213 = vshll.u32 683565275, %v210
  %v214 = vshrl.u32 2475754826, %v211
  %v215 = vor.u32 %v213, %v214
  %v216 = vshll.u32 2475754826, %v210
  %v217 = vshrl.u32 2131351028, %v211
  %v218 = vor.u32 %v216, %v217
  %v219 = vshll.u32 2131351028, %v210
  %v220 = vshrl.u32 2102212464, %v211
  %v221 = vor.u32 %v219, %v220
  %v222 = vshll.u32 2102212464, %v210
  %v223 = vshrl.u32 920167782, %v211
  %v224 = vor.u32 %v222, %v223
  %v225 = vshll.u32 920167782, %v210
  %v226 = vshrl.u32 1326507024, %v211
  %v227 = vor.u32 %v225, %v226
  %vm228 = vcmp.lt.s32.totalorder %v209, 1
  %vm229 = vcmp.lt.s32.totalorder %v209, 2
  %vm230 = vcmp.lt.s32.totalorder %v209, 3
  %vm231 = vcmp.lt.s32.totalorder %v209, 4
  %v232 = vsel %vm228, %v212, %v215
  %v233 = vsel %vm231, %v221, 2102212464
  %v234 = vsel %vm230, %v218, %v233
  %v235 = vsel %vm229, %v232, %v234
  %v236 = vsel %vm228, %v215, %v218
  %v237 = vsel %vm231, %v224, 920167782
  %v238 = vsel %vm230, %v221, %v237
  %v239 = vsel %vm229, %v236, %v238
  %v240 = vsel %vm228, %v218, %v221
  %v241 = vsel %vm231, %v227, 1326507024
  %v242 = vsel %vm230, %v224, %v241
  %v243 = vsel %vm229, %v240, %v242
  %v244 = vshll.u32 %v204, 8
  %v245 = vand.u32 %v244, 65535
  %v246 = vshrl.u32 %v244, 16
  %v247 = vand.u32 %v243, 65535
  %v248 = vshrl.u32 %v243, 16
  %v249 = vmul.u32 %v245, %v247
  %v250 = vmul.u32 %v245, %v248
  %v251 = vmul.u32 %v246, %v247
  %v252 = vmul.u32 %v246, %v248
  %v253 = vshll.u32 %v250, 16
  %v254 = vshrl.u32 %v250, 16
  %v255 = vshll.u32 %v251, 16
  %v256 = vshrl.u32 %v251, 16
  %vm257 = vc.u32 %v249, %v253
  %v258 = vsel %vm257, 1, 0
  %v259 = vadd.s32 %v249, %v253
  %v260 = vadd.s32 %v252, %v258
  %vm261 = vc.u32 %v259, %v255
  %v262 = vsel %vm261, 1, 0
  %v263 = vadd.s32 %v259, %v255
  %v264 = vadd.s32 %v260, %v262
  %v265 = vadd.s32 %v264, %v254
  %v266 = vadd.s32 %v265, %v256
  %v267 = vand.u32 %v244, 65535
  %v268 = vshrl.u32 %v244, 16
  %v269 = vand.u32 %v239, 65535
  %v270 = vshrl.u32 %v239, 16
  %v271 = vmul.u32 %v267, %v269
  %v272 = vmul.u32 %v267, %v270
  %v273 = vmul.u32 %v268, %v269
  %v274 = vmul.u32 %v268, %v270
  %v275 = vshll.u32 %v272, 16
  %v276 = vshrl.u32 %v272, 16
  %v277 = vshll.u32 %v273, 16
  %v278 = vshrl.u32 %v273, 16
  %vm279 = vc.u32 %v271, %v275
  %v280 = vsel %vm279, 1, 0
  %v281 = vadd.s32 %v271, %v275
  %v282 = vadd.s32 %v274, %v280
  %vm283 = vc.u32 %v281, %v277
  %v284 = vsel %vm283, 1, 0
  %v285 = vadd.s32 %v281, %v277
  %v286 = vadd.s32 %v282, %v284
  %v287 = vadd.s32 %v286, %v276
  %v288 = vadd.s32 %v287, %v278
  %v289 = vmul.u32 %v244, %v235
  %v290 = vadd.s32 %v266, %v285
  %vm291 = vc.u32 %v266, %v285
  %v292 = vadd.s32 %v288, 1
  %v293 = vsel %vm291, %v292, %v288
  %v294 = vadd.s32 %v289, %v293
  %v295 = vadd.s32 %v294, 536870912
  %v296 = vshrl.u32 %v295, 30
  %v297 = vshll.u32 %v296, 30
  %v298 = vsub.s32 %v294, %v297
  %vm299 = vcmp.lt.s32.totalorder %v298, 0
  %v300 = vsub.s32 0, %v298
  %v301 = vsel %vm299, %v300, %v298
  %v302 = vclz %v301
  %v303 = vsub.s32 %v302, 2
  %vm304 = vcmp.gt.s32.totalorder 0, %v303
  %v305 = vsel %vm304, 0, %v303
  %v306 = vsub.s32 32, %v305
  %v307 = vshll.u32 %v298, %v305
  %v308 = vshrl.u32 %v290, %v306
  %v309 = vor.u32 %v307, %v308
  %v310 = vsub.s32 4294967266, %v305
  %v311 = vadd.s32 %v310, 127
  %v312 = vshll.u32 %v311, 23
  %v313 = vor.u32 4788187, %v312
  %v314 = vand.u32 2147483647, %v313
  %v316 = vcvt.s32.f32 %v309
  %v317 = vmul.f32 %v316, %v314
  %v318 = vxor.u32 %v317, 2147483648
  %v319 = vsel %vm198, %v318, %v317
  %v320 = vsub.s32 4, %v296
  %v321 = vsel %vm198, %v320, %v296
  %v322 = vsel %vm197, %v195, %v319
  %v323 = vsel %vm197, 0, %v321
  %v324 = vmul.f32 %v322, %v322
  %v325 = vmul.f32 %v324, -0.001358992
  %v326 = vadd.f32 %v325, 0.041655596
  %v327 = vmul.f32 %v324, %v326
  %v328 = vadd.f32 %v327, -0.4999988
  %v329 = vmul.f32 %v324, %v328
  %v330 = vadd.f32 1.0, %v329
  %v331 = vmul.f32 %v322, %v322
  %v332 = vmul.f32 %v331, -0.00019511016
  %v333 = vadd.f32 %v332, 0.008332121
  %v334 = vmul.f32 %v331, %v333
  %v335 = vadd.f32 %v334, -0.16666654
  %v336 = vmul.f32 %v331, %v335
  %v337 = vadd.f32 %v336, 1.0
  %v338 = vmul.f32 %v337, %v322
  %vm339 = vweird.f32 %v195
  %v340 = vadd.s32 %v323, 3
  %v341 = vand.u32 %v340, 3
  %vm342 = vcmp.lt.s32.totalorder %v341, 2
  %vm343 = vcmp.eq.s32.totalorder %v341, 0
  %v344 = vxor.u32 %v338, 2147483648
  %v345 = vsel %vm343, %v330, %v344
  %vm346 = vcmp.eq.s32.totalorder %v341, 2
  %v347 = vxor.u32 %v330, 2147483648
  %v348 = vsel %vm346, %v347, %v338
  %v349 = vsel %vm342, %v345, %v348
  %v350 = vsel %vm339, nan, %v349
  %v351 = vadd.f32 %v33, %v35
  %v352 = vmul.f32 %v351, 0.017453292
  %v353 = vand.u32 2147483647, %v352
  %vm354 = vcmp.le.f32.partialorder %v353, 0.7853982
  %vm355 = vcmp.lt.s32.totalorder %v352, 0
  %v356 = vand.u32 %v352, 2139095040
  %v357 = vshrl.u32 %v356, 23
  %v358 = vsub.s32 %v357, 127
  %v359 = vand.u32 2147483647, %v352
  %v360 = vand.u32 %v359, 8388607
  %v361 = vor.u32 %v360, 8388608
  %v362 = vsub.s32 0, %v361
  %v363 = vadd.s32 %v358, 1
  %vm364 = vcmp.gt.s32.totalorder %v363, 0
  %v365 = vsel %vm364, %v363, 0
  %v366 = vshrl.u32 %v365, 5
  %v367 = vand.u32 %v365, 31
  %v368 = vsub.s32 32, %v367
  %v369 = vshrl.u32 683565275, %v368
  %v370 = vshll.u32 683565275, %v367
  %v371 = vshrl.u32 2475754826, %v368
  %v372 = vor.u32 %v370, %v371
  %v373 = vshll.u32 2475754826, %v367
  %v374 = vshrl.u32 2131351028, %v368
  %v375 = vor.u32 %v373, %v374
  %v376 = vshll.u32 2131351028, %v367
  %v377 = vshrl.u32 2102212464, %v368
  %v378 = vor.u32 %v376, %v377
  %v379 = vshll.u32 2102212464, %v367
  %v380 = vshrl.u32 920167782, %v368
  %v381 = vor.u32 %v379, %v380
  %v382 = vshll.u32 920167782, %v367
  %v383 = vshrl.u32 1326507024, %v368
  %v384 = vor.u32 %v382, %v383
  %vm385 = vcmp.lt.s32.totalorder %v366, 1
  %vm386 = vcmp.lt.s32.totalorder %v366, 2
  %vm387 = vcmp.lt.s32.totalorder %v366, 3
  %vm388 = vcmp.lt.s32.totalorder %v366, 4
  %v389 = vsel %vm385, %v369, %v372
  %v390 = vsel %vm388, %v378, 2102212464
  %v391 = vsel %vm387, %v375, %v390
  %v392 = vsel %vm386, %v389, %v391
  %v393 = vsel %vm385, %v372, %v375
  %v394 = vsel %vm388, %v381, 920167782
  %v395 = vsel %vm387, %v378, %v394
  %v396 = vsel %vm386, %v393, %v395
  %v397 = vsel %vm385, %v375, %v378
  %v398 = vsel %vm388, %v384, 1326507024
  %v399 = vsel %vm387, %v381, %v398
  %v400 = vsel %vm386, %v397, %v399
  %v401 = vshll.u32 %v361, 8
  %v402 = vand.u32 %v401, 65535
  %v403 = vshrl.u32 %v401, 16
  %v404 = vand.u32 %v400, 65535
  %v405 = vshrl.u32 %v400, 16
  %v406 = vmul.u32 %v402, %v404
  %v407 = vmul.u32 %v402, %v405
  %v408 = vmul.u32 %v403, %v404
  %v409 = vmul.u32 %v403, %v405
  %v410 = vshll.u32 %v407, 16
  %v411 = vshrl.u32 %v407, 16
  %v412 = vshll.u32 %v408, 16
  %v413 = vshrl.u32 %v408, 16
  %vm414 = vc.u32 %v406, %v410
  %v415 = vsel %vm414, 1, 0
  %v416 = vadd.s32 %v406, %v410
  %v417 = vadd.s32 %v409, %v415
  %vm418 = vc.u32 %v416, %v412
  %v419 = vsel %vm418, 1, 0
  %v420 = vadd.s32 %v416, %v412
  %v421 = vadd.s32 %v417, %v419
  %v422 = vadd.s32 %v421, %v411
  %v423 = vadd.s32 %v422, %v413
  %v424 = vand.u32 %v401, 65535
  %v425 = vshrl.u32 %v401, 16
  %v426 = vand.u32 %v396, 65535
  %v427 = vshrl.u32 %v396, 16
  %v428 = vmul.u32 %v424, %v426
  %v429 = vmul.u32 %v424, %v427
  %v430 = vmul.u32 %v425, %v426
  %v431 = vmul.u32 %v425, %v427
  %v432 = vshll.u32 %v429, 16
  %v433 = vshrl.u32 %v429, 16
  %v434 = vshll.u32 %v430, 16
  %v435 = vshrl.u32 %v430, 16
  %vm436 = vc.u32 %v428, %v432
  %v437 = vsel %vm436, 1, 0
  %v438 = vadd.s32 %v428, %v432
  %v439 = vadd.s32 %v431, %v437
  %vm440 = vc.u32 %v438, %v434
  %v441 = vsel %vm440, 1, 0
  %v442 = vadd.s32 %v438, %v434
  %v443 = vadd.s32 %v439, %v441
  %v444 = vadd.s32 %v443, %v433
  %v445 = vadd.s32 %v444, %v435
  %v446 = vmul.u32 %v401, %v392
  %v447 = vadd.s32 %v423, %v442
  %vm448 = vc.u32 %v423, %v442
  %v449 = vadd.s32 %v445, 1
  %v450 = vsel %vm448, %v449, %v445
  %v451 = vadd.s32 %v446, %v450
  %v452 = vadd.s32 %v451, 536870912
  %v453 = vshrl.u32 %v452, 30
  %v454 = vshll.u32 %v453, 30
  %v455 = vsub.s32 %v451, %v454
  %vm456 = vcmp.lt.s32.totalorder %v455, 0
  %v457 = vsub.s32 0, %v455
  %v458 = vsel %vm456, %v457, %v455
  %v459 = vclz %v458
  %v460 = vsub.s32 %v459, 2
  %vm461 = vcmp.gt.s32.totalorder 0, %v460
  %v462 = vsel %vm461, 0, %v460
  %v463 = vsub.s32 32, %v462
  %v464 = vshll.u32 %v455, %v462
  %v465 = vshrl.u32 %v447, %v463
  %v466 = vor.u32 %v464, %v465
  %v467 = vsub.s32 4294967266, %v462
  %v468 = vadd.s32 %v467, 127
  %v469 = vshll.u32 %v468, 23
  %v470 = vor.u32 4788187, %v469
  %v471 = vand.u32 2147483647, %v470
  %v473 = vcvt.s32.f32 %v466
  %v474 = vmul.f32 %v473, %v471
  %v475 = vxor.u32 %v474, 2147483648
  %v476 = vsel %vm355, %v475, %v474
  %v477 = vsub.s32 4, %v453
  %v478 = vsel %vm355, %v477, %v453
  %v479 = vsel %vm354, %v352, %v476
  %v480 = vsel %vm354, 0, %v478
  %v481 = vmul.f32 %v479, %v479
  %v482 = vmul.f32 %v481, -0.001358992
  %v483 = vadd.f32 %v482, 0.041655596
  %v484 = vmul.f32 %v481, %v483
  %v485 = vadd.f32 %v484, -0.4999988
  %v486 = vmul.f32 %v481, %v485
  %v487 = vadd.f32 1.0, %v486
  %v488 = vmul.f32 %v479, %v479
  %v489 = vmul.f32 %v488, -0.00019511016
  %v490 = vadd.f32 %v489, 0.008332121
  %v491 = vmul.f32 %v488, %v490
  %v492 = vadd.f32 %v491, -0.16666654
  %v493 = vmul.f32 %v488, %v492
  %v494 = vadd.f32 %v493, 1.0
  %v495 = vmul.f32 %v494, %v479
  %vm496 = vweird.f32 %v352
  %v497 = vand.u32 %v480, 3
  %vm498 = vcmp.lt.s32.totalorder %v497, 2
  %vm499 = vcmp.eq.s32.totalorder %v497, 0
  %v500 = vxor.u32 %v495, 2147483648
  %v501 = vsel %vm499, %v487, %v500
  %vm502 = vcmp.eq.s32.totalorder %v497, 2
  %v503 = vxor.u32 %v487, 2147483648
  %v504 = vsel %vm502, %v503, %v495
  %v505 = vsel %vm498, %v501, %v504
  %v506 = vsel %vm496, nan, %v505
  %v507 = vmul.f32 %v193, %v193
  %v508 = vmul.f32 %v350, %v350
  %v509 = vmul.f32 %v507, 2.0
  %v510 = vsub.f32 1.0, %v509
  %v511 = vadd.f32 %v510, %v506
  %v512 = vmul.f32 %v511, 0.5
  %v513 = vmul.f32 %v512, %v508
  %v514 = vadd.f32 %v507, %v513
  %v515 = vadd.f32 %v514, 1e-07
  %v516 = vrsqrt.pop %v515
  %v517 = vmul.f32 %v516, %v515
  %v518 = vmul.f32 %v517, %v516
  %v519 = vmul.f32 0.5, %v518
  %v520 = vsub.f32 1.5, %v519
  %v521 = vmul.f32 %v516, %v520
  %v522 = vmul.f32 %v515, %v521
  %vm523 = vcmp.eq.f32.partialorder %v515, inf
  %v524 = vsel %vm523, %v515, %v522
  %vm525 = vcmp.eq.f32.partialorder %v515, 0.0
  %v526 = vand.u32 %v515, 2147483648
  %v527 = vsel %vm525, %v526, %v524
  %v528 = vmin.f32 %v527, 1.0
  %vm529 = vcmp.gt.f32.partialorder %v528, 0.5
  %v530 = vsub.f32 1.0, %v528
  %v531 = vmul.f32 %v530, 0.5
  %v532 = vrsqrt.pop %v531
  %v533 = vmul.f32 %v532, %v531
  %v534 = vmul.f32 %v533, %v532
  %v535 = vmul.f32 0.5, %v534
  %v536 = vsub.f32 1.5, %v535
  %v537 = vmul.f32 %v532, %v536
  %v538 = vmul.f32 %v531, %v537
  %vm539 = vcmp.eq.f32.partialorder %v531, inf
  %v540 = vsel %vm539, %v531, %v538
  %vm541 = vcmp.eq.f32.partialorder %v531, 0.0
  %v542 = vand.u32 %v531, 2147483648
  %v543 = vsel %vm541, %v542, %v540
  %v544 = vsel %vm529, %v543, %v528
  %v545 = vmul.f32 %v528, %v528
  %v546 = vsel %vm529, %v531, %v545
  %v547 = vmul.f32 %v546, 0.0421632
  %v548 = vadd.f32 %v547, 0.024181312
  %v549 = vmul.f32 %v548, %v546
  %v550 = vadd.f32 %v549, 0.045470025
  %v551 = vmul.f32 %v550, %v546
  %v552 = vadd.f32 %v551, 0.074953005
  %v553 = vmul.f32 %v552, %v546
  %v554 = vadd.f32 %v553, 0.16666752
  %v555 = vmul.f32 %v554, %v546
  %v556 = vmul.f32 %v555, %v544
  %v557 = vadd.f32 %v556, %v544
  %v558 = vmul.f32 %v557, 2.0
  %v559 = vsub.f32 1.5707964, %v558
  %v560 = vsel %vm529, %v559, %v557
  %v561 = vld [vmem:[%s1] sm:$0xff]
  %v562 = vadd.f32 %v560, 0.0
  %v563 = vadd.f32 %v561, %v562
  %564 = vst [vmem:[%s1] sm:$0xff] %v563
  // Predicated region
  $region10: #{haversine_loss.1} parent=0 // pred_check
    _
  $region11: #{haversine_loss.1} parent=0 // pred_check_branch
    %566 = sbr.rel (0) target = $region13
  $region12: #{haversine_loss.1} parent=0 // pred_region
    _
  $region13: #{haversine_loss.1} parent=0 // pred_fallthru
    _
  // Predicated region
  $region14: #{haversine_loss.1} parent=0 // pred_check
    _
  $region15: #{haversine_loss.1} parent=0 // pred_check_branch
    %568 = sbr.rel (0) target = $region17
  $region16: #{haversine_loss.1} parent=0 // pred_region
    _
  $region17: #{haversine_loss.1} parent=0 // pred_fallthru
    _

</llo_original>
